<compile_context>
chip_gen: v7x
topology: tpu7x:2x2x1
jax: 0.10.0
libtpu: 0.0.40
codegen_flags: <defaults>
</compile_context>

<pallas_src>
import functools
import math

import jax
import jax.numpy as jnp
from jax.experimental import pallas as pl
from jax.experimental.pallas import tpu as pltpu


def _round_up(x, m):
    return ((x + m - 1) // m) * m


def _cdiv(a, b):
    return -(-a // b)


def _chip_info():
    """Trace-time chip query: (is_v7x, scoped-VMEM cap in bytes)."""
    kind = ""
    try:
        kind = jax.devices()[0].device_kind.lower()
    except Exception:
        pass
    is_v7x = "v7" in kind
    vmem_cap = (56 << 20) if is_v7x else (100 << 20)   # leave Mosaic headroom
    try:
        phys = int(pltpu.get_tpu_info().vmem_capacity_bytes)
        vmem_cap = min(vmem_cap, max(phys - (8 << 20), 32 << 20))
    except Exception:
        pass
    return is_v7x, vmem_cap


def _pick_tile(aligned, cap):
    """Largest tile <= cap (multiple of 128) that roughly evenly splits
    `aligned` (aligned is a multiple of 128)."""
    if aligned <= cap:
        return aligned
    n_blocks = _cdiv(aligned, cap)
    return _round_up(_cdiv(aligned, n_blocks), 128)


def _make_gcn_kernel(*, apply_weight, feat_resident, tk, n_valid, ragged_k):
    """Build the kernel body (static config closed over)."""

    def _load_a(a_ref, k):
        a = a_ref[...]
        if ragged_k:
            # Zero the K-tail columns (>= N) of the A tile; combined with
            # zero-padded feat rows this makes the ragged tail an exact no-op.
            col = jax.lax.broadcasted_iota(jnp.int32, a.shape, 1)
            a = jnp.where(k * tk + col < n_valid, a, jnp.zeros_like(a))
        return a

    def _load_f(f_ref, k):
        if feat_resident:
            start = pl.multiple_of(k * tk, 128)
            return f_ref[pl.ds(start, tk), :]
        return f_ref[...]

    if apply_weight:
        # acc = sum_k A[i,k] @ x0[k];  y = acc @ W.T + b
        def kernel(a_ref, f_ref, wt_ref, b_ref, o_ref, acc_ref):
            k = pl.program_id(1)

            @pl.when(k == 0)
            def _init():
                acc_ref[...] = jnp.zeros_like(acc_ref)

            acc_ref[...] += jnp.dot(_load_a(a_ref, k), _load_f(f_ref, k),
                                    preferred_element_type=jnp.float32)

            @pl.when(k == pl.num_programs(1) - 1)
            def _finalize():
                y = jnp.dot(acc_ref[...], wt_ref[...],
                            preferred_element_type=jnp.float32) + b_ref[...]
                o_ref[...] = y.astype(o_ref.dtype)
    else:
        # feat already carries W.T:  acc = sum_k A[i,k] @ xW[k];  y = acc + b
        def kernel(a_ref, f_ref, b_ref, o_ref, acc_ref):
            k = pl.program_id(1)

            @pl.when(k == 0)
            def _init():
                acc_ref[...] = jnp.zeros_like(acc_ref)

            acc_ref[...] += jnp.dot(_load_a(a_ref, k), _load_f(f_ref, k),
                                    preferred_element_type=jnp.float32)

            @pl.when(k == pl.num_programs(1) - 1)
            def _finalize():
                o_ref[...] = (acc_ref[...] + b_ref[...]).astype(o_ref.dtype)

    return kernel


@functools.partial(
    jax.jit,
    static_argnames=("tm", "tk", "stream_a_bf16", "stream_feat_bf16",
                     "resident_feat"))
def gcn_forward(A, x0, W, b, *, tm=None, tk=None, stream_a_bf16=True,
                stream_feat_bf16=False, resident_feat=None):
    """GCN forward: (A @ x0) @ W.T + b.

    A: [N, N], x0: [N, in_dim], W: [out_dim, in_dim], b: [out_dim].
    stream_a_bf16: stream A from HBM in bf16 (fp32 accumulation). Default True
      (A dominates HBM traffic; ~1e-2 rel numerics vs fp32).
    """
    N, in_dim = x0.shape
    out_dim, w_in = W.shape
    assert A.shape == (N, N)
    assert w_in == in_dim
    assert b.shape == (out_dim,)

    out_dtype = x0.dtype
    out_pad = _round_up(out_dim, 128)          # lane-dense output stores
    apply_weight = in_dim <= out_dim           # association by min(in, out)

    is_v7x, vmem_cap = _chip_info()

    # ---- Tile selection (per-generation) ------------------------------------
    aligned_n = _round_up(N, 128)
    if tm is None:
        tm = _pick_tile(aligned_n, 256 if is_v7x else 512)
        if is_v7x:
            # Prefer an even number of row tiles so both TensorCores get work.
            n_rt = _cdiv(aligned_n, tm)
            if n_rt > 1 and (n_rt % 2 == 1):
                tm = max(128, _round_up(_cdiv(aligned_n, n_rt + 1), 128))
    if tk is None:
        tk = _pick_tile(aligned_n, 1024)

    n_rows = _cdiv(N, tm)
    n_k = _cdiv(N, tk)
    ragged_k = (N % tk) != 0

    a_dtype = jnp.bfloat16 if stream_a_bf16 else jnp.float32
    f_dtype = jnp.bfloat16 if stream_feat_bf16 else jnp.float32

    # ---- Operand prep (NO O(N^2) re-pad of A; only a dtype cast) ------------
    A_s = A if A.dtype == a_dtype else A.astype(a_dtype)

    f_dim = in_dim if apply_weight else out_dim
    f_dim_pad = _round_up(f_dim, 128)          # lane-dense feat / accumulator
    feat_rows = n_k * tk                        # zero rows cover the K-tail

    W32 = W.astype(jnp.float32)
    if apply_weight:
        src = x0.astype(jnp.float32)
    else:
        # Pre-apply the (smaller) weight at high precision (tiny matmul).
        src = jnp.dot(x0.astype(jnp.float32), W32.T,
                      precision=jax.lax.Precision.HIGHEST,
                      preferred_element_type=jnp.float32)
    feat = jnp.zeros((feat_rows, f_dim_pad), jnp.float32).at[
        :N, :f_dim].set(src)
    feat = feat.astype(f_dtype)

    b2 = jnp.zeros((1, out_pad), jnp.float32).at[0, :out_dim].set(
        b.astype(jnp.float32))
    if apply_weight:
        wt_p = jnp.zeros((f_dim_pad, out_pad), jnp.float32).at[
            :in_dim, :out_dim].set(W32.T)

    # ---- feat residency decision ---------------------------------------------
    f_bytes = jnp.dtype(f_dtype).itemsize
    feat_total_bytes = feat_rows * f_dim_pad * f_bytes
    if resident_feat is None:
        resident_feat_ = feat_total_bytes <= min(vmem_cap // 4, 16 << 20)
    else:
        resident_feat_ = bool(resident_feat)

    # ---- Grid / specs ---------------------------------------------------------
    grid = (n_rows, n_k)

    a_spec = pl.BlockSpec((tm, tk), lambda i, k: (i, k))
    if resident_feat_:
        f_spec = pl.BlockSpec((feat_rows, f_dim_pad), lambda i, k: (0, 0))
    else:
        f_spec = pl.BlockSpec((tk, f_dim_pad), lambda i, k: (k, 0))
    b_spec = pl.BlockSpec((1, out_pad), lambda i, k: (0, 0))
    out_spec = pl.BlockSpec((tm, out_pad), lambda i, k: (i, 0))

    if apply_weight:
        w_spec = pl.BlockSpec((f_dim_pad, out_pad), lambda i, k: (0, 0))
        in_specs = [a_spec, f_spec, w_spec, b_spec]
        operands = (A_s, feat, wt_p, b2)
    else:
        in_specs = [a_spec, f_spec, b_spec]
        operands = (A_s, feat, b2)

    # ---- Scoped-VMEM budget (per-generation cap) ------------------------------
    a_bytes = jnp.dtype(a_dtype).itemsize
    out_bytes = jnp.dtype(out_dtype).itemsize
    est = 2 * tm * tk * a_bytes                              # A double-buffer
    est += (2 * feat_total_bytes if resident_feat_
            else 2 * tk * f_dim_pad * f_bytes)               # feat buffers
    est += 2 * tm * out_pad * out_bytes                      # output buffers
    if apply_weight:
        est += 2 * f_dim_pad * out_pad * 4                   # resident W.T
    est += tm * f_dim_pad * 4                                # accumulator
    est += 2 * 8 * out_pad * 4                               # bias (padded)
    est += 4 << 20                                           # Mosaic headroom
    vmem_limit = int(min(max(int(1.25 * est), 32 << 20), vmem_cap))

    kernel = _make_gcn_kernel(apply_weight=apply_weight,
                              feat_resident=resident_feat_,
                              tk=tk, n_valid=N, ragged_k=ragged_k)

    y_full = pl.pallas_call(
        kernel,
        out_shape=jax.ShapeDtypeStruct((N, out_pad), out_dtype),
        grid_spec=pltpu.PrefetchScalarGridSpec(
            num_scalar_prefetch=0,
            grid=grid,
            in_specs=in_specs,
            out_specs=out_spec,
            scratch_shapes=[pltpu.VMEM((tm, f_dim_pad), jnp.float32)],
        ),
        compiler_params=pltpu.CompilerParams(
            dimension_semantics=("parallel", "arbitrary"),
            vmem_limit_bytes=vmem_limit,
        ),
    )(*operands)

    return y_full[:, :out_dim]


def _init_params(key, in_dim, out_dim):
    # Mirrors the module's __init__:
    #  - weight ~ U(-1/sqrt(out_dim), 1/sqrt(out_dim))  (reset_parameters)
    #  - bias keeps nn.Linear default ~ U(-1/sqrt(in_dim), 1/sqrt(in_dim))
    k_w, k_b = jax.random.split(key)
    stdv_w = 1.0 / math.sqrt(out_dim)
    stdv_b = 1.0 / math.sqrt(in_dim)
    W = jax.random.uniform(k_w, (out_dim, in_dim), jnp.float32,
                           minval=-stdv_w, maxval=stdv_w)
    b = jax.random.uniform(k_b, (out_dim,), jnp.float32,
                           minval=-stdv_b, maxval=stdv_b)
    return W, b


def _reference(A, x0, W, b):
    hi = jax.lax.Precision.HIGHEST
    Ax = jnp.dot(A, x0, precision=hi, preferred_element_type=jnp.float32)
    return jnp.dot(Ax, W.T, precision=hi,
                   preferred_element_type=jnp.float32) + b


if __name__ == "__main__":
    key = jax.random.PRNGKey(0)
    k1, k2, k3, k4, k5, k6 = jax.random.split(key, 6)

    # Case 1: in_dim <= out_dim (weight applied in-kernel), aligned N.
    N, in_dim, out_dim = 128, 32, 64
    A = jax.random.normal(k1, (N, N), dtype=jnp.float32)
    x0 = jax.random.normal(k2, (N, in_dim), dtype=jnp.float32)
    W, b = _init_params(k3, in_dim, out_dim)
    y_ref = _reference(A, x0, W, b)

    # 1a: exact fp32 streaming path.
    y_fp32 = jax.block_until_ready(gcn_forward(A, x0, W, b,
                                               stream_a_bf16=False))
    assert y_fp32.shape == (N, out_dim)
    assert jnp.allclose(y_fp32, y_ref, atol=2e-3, rtol=2e-3), "case1 fp32"

    # 1b: default (bf16 A streaming, fp32 accumulation).
    y_bf = jax.block_until_ready(gcn_forward(A, x0, W, b))
    assert jnp.allclose(y_bf, y_ref, atol=0.5, rtol=5e-2), "case1 bf16"

    # 1c: exercise the non-resident feat path + bf16 feat streaming.
    y_nr = jax.block_until_ready(
        gcn_forward(A, x0, W, b, resident_feat=False, stream_feat_bf16=True))
    assert jnp.allclose(y_nr, y_ref, atol=0.5, rtol=5e-2), "case1 nonresident"

    # Case 2: out_dim < in_dim (xW pre-applied) + ragged N (masked K-tail).
    N2, in2, out2 = 200, 64, 32
    A2 = jax.random.normal(k4, (N2, N2), dtype=jnp.float32)
    x2 = jax.random.normal(k5, (N2, in2), dtype=jnp.float32)
    W2, b2v = _init_params(k6, in2, out2)
    y2_ref = _reference(A2, x2, W2, b2v)

    # 2a: exact path with small forced tiles -> multi-step grid (2x2),
    #     ragged masking across k steps, multi-row-tile "parallel" axis.
    y2_fp32 = jax.block_until_ready(
        gcn_forward(A2, x2, W2, b2v, tm=128, tk=128, stream_a_bf16=False))
    assert y2_fp32.shape == (N2, out2)
    assert jnp.allclose(y2_fp32, y2_ref, atol=5e-3, rtol=5e-3), "case2 fp32"

    # 2b: default bf16 A streaming, auto tiles.
    y2_bf = jax.block_until_ready(gcn_forward(A2, x2, W2, b2v))
    assert jnp.allclose(y2_bf, y2_ref, atol=0.5, rtol=5e-2), "case2 bf16"

    print("KERNEL_OK")
</pallas_src>

<mosaic_0001>
module attributes {stable_mosaic.version = 11 : i64} {
  func.func @kernel(%arg0: i32, %arg1: i32, %arg2: memref<128x128xf32, #tpu.memory_space<vmem>>, %arg3: memref<128x128xf32, #tpu.memory_space<vmem>>, %arg4: memref<128x128xf32, #tpu.memory_space<vmem>>, %arg5: memref<1x128xf32, #tpu.memory_space<vmem>>, %arg6: memref<128x128xf32, #tpu.memory_space<vmem>>, %arg7: memref<128x128xf32, #tpu.memory_space<vmem>>) attributes {dimension_semantics = [#tpu.dimension_semantics<parallel>, #tpu.dimension_semantics<arbitrary>], iteration_bounds = array<i64: 1, 1>, scalar_prefetch = 0 : i64, scratch_operands = 1 : i64, tpu.core_type = #tpu.core_type<tc>, window_params = [{transform_indices = @transform_0, window_bounds = array<i64: 128, 128>}, {pipeline_mode = #tpu.pipeline_mode<synchronous>, transform_indices = @transform_1, window_bounds = array<i64: 128, 128>}, {pipeline_mode = #tpu.pipeline_mode<synchronous>, transform_indices = @transform_2, window_bounds = array<i64: 128, 128>}, {pipeline_mode = #tpu.pipeline_mode<synchronous>, transform_indices = @transform_3, window_bounds = array<i64: 1, 128>}, {transform_indices = @transform_4, window_bounds = array<i64: 128, 128>}]} {
    %c0_i32 = arith.constant 0 : i32
    %0 = arith.cmpi eq, %arg1, %c0_i32 : i32
    %1 = arith.extui %0 : i1 to i32
    %c0_i32_0 = arith.constant 0 : i32
    %2 = arith.cmpi ne, %1, %c0_i32_0 : i32
    scf.if %2 {
      %cst_9 = arith.constant 0.000000e+00 : f32
      %15 = vector.broadcast %cst_9 : f32 to vector<128x128xf32>
      %c0_10 = arith.constant 0 : index
      %c0_11 = arith.constant 0 : index
      %16 = vector.load %arg7[%c0_10, %c0_11] : memref<128x128xf32, #tpu.memory_space<vmem>>, vector<128x128xf32>
      tpu.vector_store %arg7[%c0_10, %c0_11], %15 {strides = array<i32>} : memref<128x128xf32, #tpu.memory_space<vmem>>, vector<128x128xf32>,
    } else {
    }
    %c0 = arith.constant 0 : index
    %c0_1 = arith.constant 0 : index
    %3 = vector.load %arg7[%c0, %c0_1] : memref<128x128xf32, #tpu.memory_space<vmem>>, vector<128x128xf32>
    %c0_2 = arith.constant 0 : index
    %c0_3 = arith.constant 0 : index
    %4 = vector.load %arg2[%c0_2, %c0_3] : memref<128x128xf32, #tpu.memory_space<vmem>>, vector<128x128xf32>
    %c128_i32 = arith.constant 128 : i32
    %5 = arith.muli %arg1, %c128_i32 : i32
    %6 = tpu.assume_multiple %5, 128 : i32
    %7 = arith.index_cast %6 : i32 to index
    %c0_4 = arith.constant 0 : index
    %8 = vector.load %arg3[%7, %c0_4] : memref<128x128xf32, #tpu.memory_space<vmem>>, vector<128x128xf32>
    %cst = arith.constant dense<0.000000e+00> : vector<128x128xf32>
    %9 = tpu.matmul %4, %8, %cst {dimension_numbers = #tpu.dot_dimension_numbers<[1], [0], [0], [1], [0, 0, 1, 1], [], []>} : vector<128x128xf32>, vector<128x128xf32>, vector<128x128xf32> -> vector<128x128xf32>
    %10 = arith.addf %3, %9 : vector<128x128xf32>
    %c0_5 = arith.constant 0 : index
    %c0_6 = arith.constant 0 : index
    %11 = vector.load %arg7[%c0_5, %c0_6] : memref<128x128xf32, #tpu.memory_space<vmem>>, vector<128x128xf32>
    tpu.vector_store %arg7[%c0_5, %c0_6], %10 {strides = array<i32>} : memref<128x128xf32, #tpu.memory_space<vmem>>, vector<128x128xf32>,
    %c0_i32_7 = arith.constant 0 : i32
    %12 = arith.cmpi eq, %arg1, %c0_i32_7 : i32
    %13 = arith.extui %12 : i1 to i32
    %c0_i32_8 = arith.constant 0 : i32
    %14 = arith.cmpi ne, %13, %c0_i32_8 : i32
    scf.if %14 {
      %c0_9 = arith.constant 0 : index
      %c0_10 = arith.constant 0 : index
      %15 = vector.load %arg7[%c0_9, %c0_10] : memref<128x128xf32, #tpu.memory_space<vmem>>, vector<128x128xf32>
      %c0_11 = arith.constant 0 : index
      %c0_12 = arith.constant 0 : index
      %16 = vector.load %arg4[%c0_11, %c0_12] : memref<128x128xf32, #tpu.memory_space<vmem>>, vector<128x128xf32>
      %cst_13 = arith.constant dense<0.000000e+00> : vector<128x128xf32>
      %17 = tpu.matmul %15, %16, %cst_13 {dimension_numbers = #tpu.dot_dimension_numbers<[1], [0], [0], [1], [0, 0, 1, 1], [], []>} : vector<128x128xf32>, vector<128x128xf32>, vector<128x128xf32> -> vector<128x128xf32>
      %c0_14 = arith.constant 0 : index
      %c0_15 = arith.constant 0 : index
      %18 = vector.load %arg5[%c0_14, %c0_15] : memref<1x128xf32, #tpu.memory_space<vmem>>, vector<1x128xf32>
      %19 = vector.broadcast %18 : vector<1x128xf32> to vector<128x128xf32>
      %20 = arith.addf %17, %19 : vector<128x128xf32>
      %c0_16 = arith.constant 0 : index
      %c0_17 = arith.constant 0 : index
      %21 = vector.load %arg6[%c0_16, %c0_17] : memref<128x128xf32, #tpu.memory_space<vmem>>, vector<128x128xf32>
      tpu.vector_store %arg6[%c0_16, %c0_17], %20 {strides = array<i32>} : memref<128x128xf32, #tpu.memory_space<vmem>>, vector<128x128xf32>,
    } else {
    }
    return
  }
  func.func @transform_0(%arg0: i32, %arg1: i32) -> (i32, i32) {
    %c0_i32 = arith.constant 0 : i32
    return %arg0, %arg1 : i32, i32
  }
  func.func @transform_1(%arg0: i32, %arg1: i32) -> (i32, i32) {
    %c0_i32 = arith.constant 0 : i32
    %c0_i32_0 = arith.constant 0 : i32
    %c0_i32_1 = arith.constant 0 : i32
    return %c0_i32, %c0_i32_0 : i32, i32
  }
  func.func @transform_2(%arg0: i32, %arg1: i32) -> (i32, i32) {
    %c0_i32 = arith.constant 0 : i32
    %c0_i32_0 = arith.constant 0 : i32
    %c0_i32_1 = arith.constant 0 : i32
    return %c0_i32, %c0_i32_0 : i32, i32
  }
  func.func @transform_3(%arg0: i32, %arg1: i32) -> (i32, i32) {
    %c0_i32 = arith.constant 0 : i32
    %c0_i32_0 = arith.constant 0 : i32
    %c0_i32_1 = arith.constant 0 : i32
    return %c0_i32, %c0_i32_0 : i32, i32
  }
  func.func @transform_4(%arg0: i32, %arg1: i32) -> (i32, i32) {
    %c0_i32 = arith.constant 0 : i32
    %c0_i32_0 = arith.constant 0 : i32
    return %arg0, %c0_i32 : i32, i32
  }
}

</mosaic_0001>

<llo_original>
// kernel: gcn_forward.1
$region0: #{gcn_forward.1}
  #allocation0 [shape = 'u32[]', space=smem, size = 0x4, offset = 0x4, fixed_abs, tag = 'smem constant byte address 0x4 - core index']
  #allocation1 [shape = 'u32[144,128]{1,0:T(1,128)}', space=vmem, size = 0x12000, scoped, tag = 'internal scratch']
  #allocation2 [shape = 'f32[128,128]{1,0:T(8,128)}', space=vmem, size = 0x10000, scoped, tag = 'scratch operand']
  %s0 = inlined_call_operand.vmem [shape: f32[128,128], index: 0, kind: input, shape index: {}]
  %s1 = inlined_call_operand.vmem [shape: f32[128,128], index: 1, kind: input, shape index: {}]
  %s2 = inlined_call_operand.vmem [shape: f32[128,128], index: 2, kind: input, shape index: {}]
  %s3 = inlined_call_operand.vmem [shape: f32[1,128], index: 3, kind: input, shape index: {}]
  %s4 = inlined_call_operand.vmem [shape: f32[128,128], index: 4, kind: output, shape index: {}]
  %s5 = sld [smem:[#allocation0]]
  $region34: #{gcn_forward.1} parent=0
    _
  %s7 = ssub.s32 1, %s5
  %s8 = scalar_select 0, %s7, %s5
  // Predicated region
  $region2: #{gcn_forward.1} parent=0 // pred_check
    _
  $region3: #{gcn_forward.1} parent=0 // pred_check_branch
    %10 = sbr.rel (0) target = $region5
  $region4: #{gcn_forward.1} parent=0 // pred_region
    _
  $region5: #{gcn_forward.1} parent=0 // pred_fallthru
    _
  // Predicated region
  $region6: #{gcn_forward.1} parent=0 // pred_check
    _
  $region7: #{gcn_forward.1} parent=0 // pred_check_branch
    %12 = sbr.rel (0) target = $region9
  $region8: #{gcn_forward.1} parent=0 // pred_region
    _
  $region9: #{gcn_forward.1} parent=0 // pred_fallthru
    _
  // Predicated region
  $region10: #{gcn_forward.1} parent=0 // pred_check
    _
  $region11: #{gcn_forward.1} parent=0 // pred_check_branch
    %14 = sbr.rel (0) target = $region13
  $region12: #{gcn_forward.1} parent=0 // pred_region
    _
  $region13: #{gcn_forward.1} parent=0 // pred_fallthru
    _
  // Predicated region
  $region14: #{gcn_forward.1} parent=0 // pred_check
    _
  $region15: #{gcn_forward.1} parent=0 // pred_check_branch
    %16 = sbr.rel (0) target = $region17
  $region16: #{gcn_forward.1} parent=0 // pred_region
    _
  $region17: #{gcn_forward.1} parent=0 // pred_fallthru
    _
  %p17 = scmp.eq.s32.totalorder 0, 0
  // Predicated region
  $region18: #{gcn_forward.1} parent=0 // pred_check
    %p18 = pneg %p17
  $region19: #{gcn_forward.1} parent=0 // pred_check_branch
    %20 = sbr.rel (%p18) target = $region21
  $region20: #{gcn_forward.1} parent=0 // pred_region
    %21 = vst [vmem:[#allocation2] sm:$0xff] 0.0
    %22 = vst [vmem:[#allocation2 + $0x8] sm:$0xff] 0.0
    %23 = vst [vmem:[#allocation2 + $0x10] sm:$0xff] 0.0
    %24 = vst [vmem:[#allocation2 + $0x18] sm:$0xff] 0.0
    %25 = vst [vmem:[#allocation2 + $0x20] sm:$0xff] 0.0
    %26 = vst [vmem:[#allocation2 + $0x28] sm:$0xff] 0.0
    %27 = vst [vmem:[#allocation2 + $0x30] sm:$0xff] 0.0
    %28 = vst [vmem:[#allocation2 + $0x38] sm:$0xff] 0.0
    %29 = vst [vmem:[#allocation2 + $0x40] sm:$0xff] 0.0
    %30 = vst [vmem:[#allocation2 + $0x48] sm:$0xff] 0.0
    %31 = vst [vmem:[#allocation2 + $0x50] sm:$0xff] 0.0
    %32 = vst [vmem:[#allocation2 + $0x58] sm:$0xff] 0.0
    %33 = vst [vmem:[#allocation2 + $0x60] sm:$0xff] 0.0
    %34 = vst [vmem:[#allocation2 + $0x68] sm:$0xff] 0.0
    %35 = vst [vmem:[#allocation2 + $0x70] sm:$0xff] 0.0
    %36 = vst [vmem:[#allocation2 + $0x78] sm:$0xff] 0.0
  $region21: #{gcn_forward.1} parent=0 // pred_fallthru
    _
  %v37 = vld [vmem:[#allocation2] sm:$0xff]
  %v38 = vld [vmem:[#allocation2 + $0x8] sm:$0xff]
  %v39 = vld [vmem:[#allocation2 + $0x10] sm:$0xff]
  %v40 = vld [vmem:[#allocation2 + $0x18] sm:$0xff]
  %v41 = vld [vmem:[#allocation2 + $0x20] sm:$0xff]
  %v42 = vld [vmem:[#allocation2 + $0x28] sm:$0xff]
  %v43 = vld [vmem:[#allocation2 + $0x30] sm:$0xff]
  %v44 = vld [vmem:[#allocation2 + $0x38] sm:$0xff]
  %v45 = vld [vmem:[#allocation2 + $0x40] sm:$0xff]
  %v46 = vld [vmem:[#allocation2 + $0x48] sm:$0xff]
  %v47 = vld [vmem:[#allocation2 + $0x50] sm:$0xff]
  %v48 = vld [vmem:[#allocation2 + $0x58] sm:$0xff]
  %v49 = vld [vmem:[#allocation2 + $0x60] sm:$0xff]
  %v50 = vld [vmem:[#allocation2 + $0x68] sm:$0xff]
  %v51 = vld [vmem:[#allocation2 + $0x70] sm:$0xff]
  %v52 = vld [vmem:[#allocation2 + $0x78] sm:$0xff]
  %v53 = vld [vmem:[%s0] sm:$0xff]
  %v54 = vld [vmem:[%s0 + $0x8] sm:$0xff]
  %v55 = vld [vmem:[%s0 + $0x10] sm:$0xff]
  %v56 = vld [vmem:[%s0 + $0x18] sm:$0xff]
  %v57 = vld [vmem:[%s0 + $0x20] sm:$0xff]
  %v58 = vld [vmem:[%s0 + $0x28] sm:$0xff]
  %v59 = vld [vmem:[%s0 + $0x30] sm:$0xff]
  %v60 = vld [vmem:[%s0 + $0x38] sm:$0xff]
  %v61 = vld [vmem:[%s0 + $0x40] sm:$0xff]
  %v62 = vld [vmem:[%s0 + $0x48] sm:$0xff]
  %v63 = vld [vmem:[%s0 + $0x50] sm:$0xff]
  %v64 = vld [vmem:[%s0 + $0x58] sm:$0xff]
  %v65 = vld [vmem:[%s0 + $0x60] sm:$0xff]
  %v66 = vld [vmem:[%s0 + $0x68] sm:$0xff]
  %v67 = vld [vmem:[%s0 + $0x70] sm:$0xff]
  %v68 = vld [vmem:[%s0 + $0x78] sm:$0xff]
  %s69 = smul.u32 0, 128
  %s70 = scalar_lea.vmem %s1, %s69
  %v71 = vld [vmem:[%s70] sm:$0xff]
  %v72 = vld [vmem:[%s70 + $0x8] sm:$0xff]
  %v73 = vld [vmem:[%s70 + $0x10] sm:$0xff]
  %v74 = vld [vmem:[%s70 + $0x18] sm:$0xff]
  %v75 = vld [vmem:[%s70 + $0x20] sm:$0xff]
  %v76 = vld [vmem:[%s70 + $0x28] sm:$0xff]
  %v77 = vld [vmem:[%s70 + $0x30] sm:$0xff]
  %v78 = vld [vmem:[%s70 + $0x38] sm:$0xff]
  %v79 = vld [vmem:[%s70 + $0x40] sm:$0xff]
  %v80 = vld [vmem:[%s70 + $0x48] sm:$0xff]
  %v81 = vld [vmem:[%s70 + $0x50] sm:$0xff]
  %v82 = vld [vmem:[%s70 + $0x58] sm:$0xff]
  %v83 = vld [vmem:[%s70 + $0x60] sm:$0xff]
  %v84 = vld [vmem:[%s70 + $0x68] sm:$0xff]
  %v85 = vld [vmem:[%s70 + $0x70] sm:$0xff]
  %v86 = vld [vmem:[%s70 + $0x78] sm:$0xff]
  %87 = vmatprep.subr.mxu0 0.0
  %88 = vmatpush1.msra.mxu0 %v71
  %89 = vmatprep.subr.mxu0 0.0
  %90 = vmatpush1.msra.mxu0 %v72
  %91 = vmatprep.subr.mxu0 0.0
  %92 = vmatpush1.msra.mxu0 %v73
  %93 = vmatprep.subr.mxu0 0.0
  %94 = vmatpush1.msra.mxu0 %v74
  %95 = vmatprep.subr.mxu0 0.0
  %96 = vmatpush1.msra.mxu0 %v75
  %97 = vmatprep.subr.mxu0 0.0
  %98 = vmatpush1.msra.mxu0 %v76
  %99 = vmatprep.subr.mxu0 0.0
  %100 = vmatpush1.msra.mxu0 %v77
  %101 = vmatprep.subr.mxu0 0.0
  %102 = vmatpush1.msra.mxu0 %v78
  %103 = vmatprep.subr.mxu0 0.0
  %104 = vmatpush1.msra.mxu0 %v79
  %105 = vmatprep.subr.mxu0 0.0
  %106 = vmatpush1.msra.mxu0 %v80
  %107 = vmatprep.subr.mxu0 0.0
  %108 = vmatpush1.msra.mxu0 %v81
  %109 = vmatprep.subr.mxu0 0.0
  %110 = vmatpush1.msra.mxu0 %v82
  %111 = vmatprep.subr.mxu0 0.0
  %112 = vmatpush1.msra.mxu0 %v83
  %113 = vmatprep.subr.mxu0 0.0
  %114 = vmatpush1.msra.mxu0 %v84
  %115 = vmatprep.subr.mxu0 0.0
  %116 = vmatpush1.msra.mxu0 %v85
  %117 = vmatprep.subr.mxu0 0.0
  %118 = vmatpush1.msra.mxu0 %v86
  %119 = vmatprep.subr.mxu0 0.0
  %120 = vmatpush1.msra.mxu0 0.0
  %121 = vmatprep.subr.mxu0 0.0
  %122 = vmatpush1.msra.mxu0 0.0
  %123 = vmatprep.subr.mxu0 0.0
  %124 = vmatpush1.msra.mxu0 0.0
  %125 = vmatprep.subr.mxu0 0.0
  %126 = vmatpush1.msra.mxu0 0.0
  %127 = vmatprep.subr.mxu0 0.0
  %128 = vmatpush1.msra.mxu0 0.0
  %129 = vmatprep.subr.mxu0 0.0
  %130 = vmatpush1.msra.mxu0 0.0
  %131 = vmatprep.subr.mxu0 0.0
  %132 = vmatpush1.msra.mxu0 0.0
  %133 = vmatprep.subr.mxu0 0.0
  %134 = vmatpush1.msra.mxu0 0.0
  %135 = vmatprep.subr.mxu0 0.0
  %136 = vmatpush1.msra.mxu0 0.0
  %137 = vmatprep.subr.mxu0 0.0
  %138 = vmatpush1.msra.mxu0 0.0
  %139 = vmatprep.subr.mxu0 0.0
  %140 = vmatpush1.msra.mxu0 0.0
  %141 = vmatprep.subr.mxu0 0.0
  %142 = vmatpush1.msra.mxu0 0.0
  %143 = vmatprep.subr.mxu0 0.0
  %144 = vmatpush1.msra.mxu0 0.0
  %145 = vmatprep.subr.mxu0 0.0
  %146 = vmatpush1.msra.mxu0 0.0
  %147 = vmatprep.subr.mxu0 0.0
  %148 = vmatpush1.msra.mxu0 0.0
  %149 = vmatprep.subr.mxu0 0.0
  %150 = vmatpush1.msra.mxu0 0.0
  %151 = vmatprep.mubr.f32.mxu0 0.0
  %152 = vmatmul.mubr.f32.gmra.mrb[0].mxu0 %v53
  %v153 = vpop.f32.mrb[0].mxu0
  %v154 = vadd.f32 0.0, %v153
  %v155 = vpop.f32.mrb[0].mxu0
  %156 = vmatprep.mubr.f32.mxu0 0.0
  %157 = vmatmul.mubr.f32.gmra.mrb[0].mxu0 %v54
  %v158 = vpop.f32.mrb[0].mxu0
  %v159 = vadd.f32 0.0, %v158
  %v160 = vpop.f32.mrb[0].mxu0
  %161 = vmatprep.mubr.f32.mxu0 0.0
  %162 = vmatmul.mubr.f32.gmra.mrb[0].mxu0 %v55
  %v163 = vpop.f32.mrb[0].mxu0
  %v164 = vadd.f32 0.0, %v163
  %v165 = vpop.f32.mrb[0].mxu0
  %166 = vmatprep.mubr.f32.mxu0 0.0
  %167 = vmatmul.mubr.f32.gmra.mrb[0].mxu0 %v56
  %v168 = vpop.f32.mrb[0].mxu0
  %v169 = vadd.f32 0.0, %v168
  %v170 = vpop.f32.mrb[0].mxu0
  %171 = vmatprep.mubr.f32.mxu0 0.0
  %172 = vmatmul.mubr.f32.gmra.mrb[0].mxu0 %v57
  %v173 = vpop.f32.mrb[0].mxu0
  %v174 = vadd.f32 0.0, %v173
  %v175 = vpop.f32.mrb[0].mxu0
  %176 = vmatprep.mubr.f32.mxu0 0.0
  %177 = vmatmul.mubr.f32.gmra.mrb[0].mxu0 %v58
  %v178 = vpop.f32.mrb[0].mxu0
  %v179 = vadd.f32 0.0, %v178
  %v180 = vpop.f32.mrb[0].mxu0
  %181 = vmatprep.mubr.f32.mxu0 0.0
  %182 = vmatmul.mubr.f32.gmra.mrb[0].mxu0 %v59
  %v183 = vpop.f32.mrb[0].mxu0
  %v184 = vadd.f32 0.0, %v183
  %v185 = vpop.f32.mrb[0].mxu0
  %186 = vmatprep.mubr.f32.mxu0 0.0
  %187 = vmatmul.mubr.f32.gmra.mrb[0].mxu0 %v60
  %v188 = vpop.f32.mrb[0].mxu0
  %v189 = vadd.f32 0.0, %v188
  %v190 = vpop.f32.mrb[0].mxu0
  %191 = vmatprep.mubr.f32.mxu0 0.0
  %192 = vmatmul.mubr.f32.gmra.mrb[0].mxu0 %v61
  %v193 = vpop.f32.mrb[0].mxu0
  %v194 = vadd.f32 0.0, %v193
  %v195 = vpop.f32.mrb[0].mxu0
  %196 = vmatprep.mubr.f32.mxu0 0.0
  %197 = vmatmul.mubr.f32.gmra.mrb[0].mxu0 %v62
  %v198 = vpop.f32.mrb[0].mxu0
  %v199 = vadd.f32 0.0, %v198
  %v200 = vpop.f32.mrb[0].mxu0
  %201 = vmatprep.mubr.f32.mxu0 0.0
  %202 = vmatmul.mubr.f32.gmra.mrb[0].mxu0 %v63
  %v203 = vpop.f32.mrb[0].mxu0
  %v204 = vadd.f32 0.0, %v203
  %v205 = vpop.f32.mrb[0].mxu0
  %206 = vmatprep.mubr.f32.mxu0 0.0
  %207 = vmatmul.mubr.f32.gmra.mrb[0].mxu0 %v64
  %v208 = vpop.f32.mrb[0].mxu0
  %v209 = vadd.f32 0.0, %v208
  %v210 = vpop.f32.mrb[0].mxu0
  %211 = vmatprep.mubr.f32.mxu0 0.0
  %212 = vmatmul.mubr.f32.gmra.mrb[0].mxu0 %v65
  %v213 = vpop.f32.mrb[0].mxu0
  %v214 = vadd.f32 0.0, %v213
  %v215 = vpop.f32.mrb[0].mxu0
  %216 = vmatprep.mubr.f32.mxu0 0.0
  %217 = vmatmul.mubr.f32.gmra.mrb[0].mxu0 %v66
  %v218 = vpop.f32.mrb[0].mxu0
  %v219 = vadd.f32 0.0, %v218
  %v220 = vpop.f32.mrb[0].mxu0
  %221 = vmatprep.mubr.f32.mxu0 0.0
  %222 = vmatmul.mubr.f32.gmra.mrb[0].mxu0 %v67
  %v223 = vpop.f32.mrb[0].mxu0
  %v224 = vadd.f32 0.0, %v223
  %v225 = vpop.f32.mrb[0].mxu0
  %226 = vmatprep.mubr.f32.mxu0 0.0
  %227 = vmatmul.mubr.f32.gmra.mrb[0].mxu0 %v68
  %v228 = vpop.f32.mrb[0].mxu0
  %v229 = vadd.f32 0.0, %v228
  %v230 = vpop.f32.mrb[0].mxu0
  %231 = vdwg.mxu0
  %v232 = vadd.f32 %v37, %v154
  %v233 = vadd.f32 %v38, %v159
  %v234 = vadd.f32 %v39, %v164
  %v235 = vadd.f32 %v40, %v169
  %v236 = vadd.f32 %v41, %v174
  %v237 = vadd.f32 %v42, %v179
  %v238 = vadd.f32 %v43, %v184
  %v239 = vadd.f32 %v44, %v189
  %v240 = vadd.f32 %v45, %v194
  %v241 = vadd.f32 %v46, %v199
  %v242 = vadd.f32 %v47, %v204
  %v243 = vadd.f32 %v48, %v209
  %v244 = vadd.f32 %v49, %v214
  %v245 = vadd.f32 %v50, %v219
  %v246 = vadd.f32 %v51, %v224
  %v247 = vadd.f32 %v52, %v229
  %248 = vst [vmem:[#allocation2] sm:$0xff] %v232
  %249 = vst [vmem:[#allocation2 + $0x8] sm:$0xff] %v233
  %250 = vst [vmem:[#allocation2 + $0x10] sm:$0xff] %v234
  %251 = vst [vmem:[#allocation2 + $0x18] sm:$0xff] %v235
  %252 = vst [vmem:[#allocation2 + $0x20] sm:$0xff] %v236
  %253 = vst [vmem:[#allocation2 + $0x28] sm:$0xff] %v237
  %254 = vst [vmem:[#allocation2 + $0x30] sm:$0xff] %v238
  %255 = vst [vmem:[#allocation2 + $0x38] sm:$0xff] %v239
  %256 = vst [vmem:[#allocation2 + $0x40] sm:$0xff] %v240
  %257 = vst [vmem:[#allocation2 + $0x48] sm:$0xff] %v241
  %258 = vst [vmem:[#allocation2 + $0x50] sm:$0xff] %v242
  %259 = vst [vmem:[#allocation2 + $0x58] sm:$0xff] %v243
  %260 = vst [vmem:[#allocation2 + $0x60] sm:$0xff] %v244
  %261 = vst [vmem:[#allocation2 + $0x68] sm:$0xff] %v245
  %262 = vst [vmem:[#allocation2 + $0x70] sm:$0xff] %v246
  %263 = vst [vmem:[#allocation2 + $0x78] sm:$0xff] %v247
  // Predicated region
  $region22: #{gcn_forward.1} parent=0 // pred_check
    %p264 = pneg %p17
  $region23: #{gcn_forward.1} parent=0 // pred_check_branch
    %266 = sbr.rel (%p264) target = $region25
  $region24: #{gcn_forward.1} parent=0 // pred_region
    %v267 = vld [vmem:[#allocation2] sm:$0xff]
    %v268 = vld [vmem:[#allocation2 + $0x8] sm:$0xff]
    %v269 = vld [vmem:[#allocation2 + $0x10] sm:$0xff]
    %v270 = vld [vmem:[#allocation2 + $0x18] sm:$0xff]
    %v271 = vld [vmem:[#allocation2 + $0x20] sm:$0xff]
    %v272 = vld [vmem:[#allocation2 + $0x28] sm:$0xff]
    %v273 = vld [vmem:[#allocation2 + $0x30] sm:$0xff]
    %v274 = vld [vmem:[#allocation2 + $0x38] sm:$0xff]
    %v275 = vld [vmem:[#allocation2 + $0x40] sm:$0xff]
    %v276 = vld [vmem:[#allocation2 + $0x48] sm:$0xff]
    %v277 = vld [vmem:[#allocation2 + $0x50] sm:$0xff]
    %v278 = vld [vmem:[#allocation2 + $0x58] sm:$0xff]
    %v279 = vld [vmem:[#allocation2 + $0x60] sm:$0xff]
    %v280 = vld [vmem:[#allocation2 + $0x68] sm:$0xff]
    %v281 = vld [vmem:[#allocation2 + $0x70] sm:$0xff]
    %v282 = vld [vmem:[#allocation2 + $0x78] sm:$0xff]
    %v283 = vld [vmem:[%s2] sm:$0xff]
    %v284 = vld [vmem:[%s2 + $0x8] sm:$0xff]
    %v285 = vld [vmem:[%s2 + $0x10] sm:$0xff]
    %v286 = vld [vmem:[%s2 + $0x18] sm:$0xff]
    %v287 = vld [vmem:[%s2 + $0x20] sm:$0xff]
    %v288 = vld [vmem:[%s2 + $0x28] sm:$0xff]
    %v289 = vld [vmem:[%s2 + $0x30] sm:$0xff]
    %v290 = vld [vmem:[%s2 + $0x38] sm:$0xff]
    %v291 = vld [vmem:[%s2 + $0x40] sm:$0xff]
    %v292 = vld [vmem:[%s2 + $0x48] sm:$0xff]
    %v293 = vld [vmem:[%s2 + $0x50] sm:$0xff]
    %v294 = vld [vmem:[%s2 + $0x58] sm:$0xff]
    %v295 = vld [vmem:[%s2 + $0x60] sm:$0xff]
    %v296 = vld [vmem:[%s2 + $0x68] sm:$0xff]
    %v297 = vld [vmem:[%s2 + $0x70] sm:$0xff]
    %v298 = vld [vmem:[%s2 + $0x78] sm:$0xff]
    %v299 = vld [vmem:[%s3] sm:$0x1]
    %v301 = vlaneseq
    %v302 = vshrl.u32 %v301, 7
    %v303 = vsub.s32 0, %v302
    %v304 = vrot.slane %v299, %v303
    %306 = vmatprep.subr.mxu0 0.0
    %307 = vmatpush1.msra.mxu0 %v283
    %308 = vmatprep.subr.mxu0 0.0
    %309 = vmatpush1.msra.mxu0 %v284
    %310 = vmatprep.subr.mxu0 0.0
    %311 = vmatpush1.msra.mxu0 %v285
    %312 = vmatprep.subr.mxu0 0.0
    %313 = vmatpush1.msra.mxu0 %v286
    %314 = vmatprep.subr.mxu0 0.0
    %315 = vmatpush1.msra.mxu0 %v287
    %316 = vmatprep.subr.mxu0 0.0
    %317 = vmatpush1.msra.mxu0 %v288
    %318 = vmatprep.subr.mxu0 0.0
    %319 = vmatpush1.msra.mxu0 %v289
    %320 = vmatprep.subr.mxu0 0.0
    %321 = vmatpush1.msra.mxu0 %v290
    %322 = vmatprep.subr.mxu0 0.0
    %323 = vmatpush1.msra.mxu0 %v291
    %324 = vmatprep.subr.mxu0 0.0
    %325 = vmatpush1.msra.mxu0 %v292
    %326 = vmatprep.subr.mxu0 0.0
    %327 = vmatpush1.msra.mxu0 %v293
    %328 = vmatprep.subr.mxu0 0.0
    %329 = vmatpush1.msra.mxu0 %v294
    %330 = vmatprep.subr.mxu0 0.0
    %331 = vmatpush1.msra.mxu0 %v295
    %332 = vmatprep.subr.mxu0 0.0
    %333 = vmatpush1.msra.mxu0 %v296
    %334 = vmatprep.subr.mxu0 0.0
    %335 = vmatpush1.msra.mxu0 %v297
    %336 = vmatprep.subr.mxu0 0.0
    %337 = vmatpush1.msra.mxu0 %v298
    %338 = vmatprep.subr.mxu0 0.0
    %339 = vmatpush1.msra.mxu0 0.0
    %340 = vmatprep.subr.mxu0 0.0
    %341 = vmatpush1.msra.mxu0 0.0
    %342 = vmatprep.subr.mxu0 0.0
    %343 = vmatpush1.msra.mxu0 0.0
    %344 = vmatprep.subr.mxu0 0.0
    %345 = vmatpush1.msra.mxu0 0.0
    %346 = vmatprep.subr.mxu0 0.0
    %347 = vmatpush1.msra.mxu0 0.0
    %348 = vmatprep.subr.mxu0 0.0
    %349 = vmatpush1.msra.mxu0 0.0
    %350 = vmatprep.subr.mxu0 0.0
    %351 = vmatpush1.msra.mxu0 0.0
    %352 = vmatprep.subr.mxu0 0.0
    %353 = vmatpush1.msra.mxu0 0.0
    %354 = vmatprep.subr.mxu0 0.0
    %355 = vmatpush1.msra.mxu0 0.0
    %356 = vmatprep.subr.mxu0 0.0
    %357 = vmatpush1.msra.mxu0 0.0
    %358 = vmatprep.subr.mxu0 0.0
    %359 = vmatpush1.msra.mxu0 0.0
    %360 = vmatprep.subr.mxu0 0.0
    %361 = vmatpush1.msra.mxu0 0.0
    %362 = vmatprep.subr.mxu0 0.0
    %363 = vmatpush1.msra.mxu0 0.0
    %364 = vmatprep.subr.mxu0 0.0
    %365 = vmatpush1.msra.mxu0 0.0
    %366 = vmatprep.subr.mxu0 0.0
    %367 = vmatpush1.msra.mxu0 0.0
    %368 = vmatprep.subr.mxu0 0.0
    %369 = vmatpush1.msra.mxu0 0.0
    %370 = vmatprep.mubr.f32.mxu0 0.0
    %371 = vmatmul.mubr.f32.gmra.mrb[0].mxu0 %v267
    %v372 = vpop.f32.mrb[0].mxu0
    %v373 = vadd.f32 %v304, %v372
    %v374 = vpop.f32.mrb[0].mxu0
    %375 = vmatprep.mubr.f32.mxu0 0.0
    %376 = vmatmul.mubr.f32.gmra.mrb[0].mxu0 %v268
    %v377 = vpop.f32.mrb[0].mxu0
    %v378 = vadd.f32 %v304, %v377
    %v379 = vpop.f32.mrb[0].mxu0
    %380 = vmatprep.mubr.f32.mxu0 0.0
    %381 = vmatmul.mubr.f32.gmra.mrb[0].mxu0 %v269
    %v382 = vpop.f32.mrb[0].mxu0
    %v383 = vadd.f32 %v304, %v382
    %v384 = vpop.f32.mrb[0].mxu0
    %385 = vmatprep.mubr.f32.mxu0 0.0
    %386 = vmatmul.mubr.f32.gmra.mrb[0].mxu0 %v270
    %v387 = vpop.f32.mrb[0].mxu0
    %v388 = vadd.f32 %v304, %v387
    %v389 = vpop.f32.mrb[0].mxu0
    %390 = vmatprep.mubr.f32.mxu0 0.0
    %391 = vmatmul.mubr.f32.gmra.mrb[0].mxu0 %v271
    %v392 = vpop.f32.mrb[0].mxu0
    %v393 = vadd.f32 %v304, %v392
    %v394 = vpop.f32.mrb[0].mxu0
    %395 = vmatprep.mubr.f32.mxu0 0.0
    %396 = vmatmul.mubr.f32.gmra.mrb[0].mxu0 %v272
    %v397 = vpop.f32.mrb[0].mxu0
    %v398 = vadd.f32 %v304, %v397
    %v399 = vpop.f32.mrb[0].mxu0
    %400 = vmatprep.mubr.f32.mxu0 0.0
    %401 = vmatmul.mubr.f32.gmra.mrb[0].mxu0 %v273
    %v402 = vpop.f32.mrb[0].mxu0
    %v403 = vadd.f32 %v304, %v402
    %v404 = vpop.f32.mrb[0].mxu0
    %405 = vmatprep.mubr.f32.mxu0 0.0
    %406 = vmatmul.mubr.f32.gmra.mrb[0].mxu0 %v274
    %v407 = vpop.f32.mrb[0].mxu0
    %v408 = vadd.f32 %v304, %v407
    %v409 = vpop.f32.mrb[0].mxu0
    %410 = vmatprep.mubr.f32.mxu0 0.0
    %411 = vmatmul.mubr.f32.gmra.mrb[0].mxu0 %v275
    %v412 = vpop.f32.mrb[0].mxu0
    %v413 = vadd.f32 %v304, %v412
    %v414 = vpop.f32.mrb[0].mxu0
    %415 = vmatprep.mubr.f32.mxu0 0.0
    %416 = vmatmul.mubr.f32.gmra.mrb[0].mxu0 %v276
    %v417 = vpop.f32.mrb[0].mxu0
    %v418 = vadd.f32 %v304, %v417
    %v419 = vpop.f32.mrb[0].mxu0
    %420 = vmatprep.mubr.f32.mxu0 0.0
    %421 = vmatmul.mubr.f32.gmra.mrb[0].mxu0 %v277
    %v422 = vpop.f32.mrb[0].mxu0
    %v423 = vadd.f32 %v304, %v422
    %v424 = vpop.f32.mrb[0].mxu0
    %425 = vmatprep.mubr.f32.mxu0 0.0
    %426 = vmatmul.mubr.f32.gmra.mrb[0].mxu0 %v278
    %v427 = vpop.f32.mrb[0].mxu0
    %v428 = vadd.f32 %v304, %v427
    %v429 = vpop.f32.mrb[0].mxu0
    %430 = vmatprep.mubr.f32.mxu0 0.0
    %431 = vmatmul.mubr.f32.gmra.mrb[0].mxu0 %v279
    %v432 = vpop.f32.mrb[0].mxu0
    %v433 = vadd.f32 %v304, %v432
    %v434 = vpop.f32.mrb[0].mxu0
    %435 = vmatprep.mubr.f32.mxu0 0.0
    %436 = vmatmul.mubr.f32.gmra.mrb[0].mxu0 %v280
    %v437 = vpop.f32.mrb[0].mxu0
    %v438 = vadd.f32 %v304, %v437
    %v439 = vpop.f32.mrb[0].mxu0
    %440 = vmatprep.mubr.f32.mxu0 0.0
    %441 = vmatmul.mubr.f32.gmra.mrb[0].mxu0 %v281
    %v442 = vpop.f32.mrb[0].mxu0
    %v443 = vadd.f32 %v304, %v442
    %v444 = vpop.f32.mrb[0].mxu0
    %445 = vmatprep.mubr.f32.mxu0 0.0
    %446 = vmatmul.mubr.f32.gmra.mrb[0].mxu0 %v282
    %v447 = vpop.f32.mrb[0].mxu0
    %v448 = vadd.f32 %v304, %v447
    %v449 = vpop.f32.mrb[0].mxu0
    %450 = vdwg.mxu0
    %451 = vst [vmem:[%s4] sm:$0xff] %v373
    %452 = vst [vmem:[%s4 + $0x8] sm:$0xff] %v378
    %453 = vst [vmem:[%s4 + $0x10] sm:$0xff] %v383
    %454 = vst [vmem:[%s4 + $0x18] sm:$0xff] %v388
    %455 = vst [vmem:[%s4 + $0x20] sm:$0xff] %v393
    %456 = vst [vmem:[%s4 + $0x28] sm:$0xff] %v398
    %457 = vst [vmem:[%s4 + $0x30] sm:$0xff] %v403
    %458 = vst [vmem:[%s4 + $0x38] sm:$0xff] %v408
    %459 = vst [vmem:[%s4 + $0x40] sm:$0xff] %v413
    %460 = vst [vmem:[%s4 + $0x48] sm:$0xff] %v418
    %461 = vst [vmem:[%s4 + $0x50] sm:$0xff] %v423
    %462 = vst [vmem:[%s4 + $0x58] sm:$0xff] %v428
    %463 = vst [vmem:[%s4 + $0x60] sm:$0xff] %v433
    %464 = vst [vmem:[%s4 + $0x68] sm:$0xff] %v438
    %465 = vst [vmem:[%s4 + $0x70] sm:$0xff] %v443
    %466 = vst [vmem:[%s4 + $0x78] sm:$0xff] %v448
  $region25: #{gcn_forward.1} parent=0 // pred_fallthru
    _
  // Predicated region
  $region26: #{gcn_forward.1} parent=0 // pred_check
    _
  $region27: #{gcn_forward.1} parent=0 // pred_check_branch
    %468 = sbr.rel (0) target = $region29
  $region28: #{gcn_forward.1} parent=0 // pred_region
    _
  $region29: #{gcn_forward.1} parent=0 // pred_fallthru
    _
  // Predicated region
  $region30: #{gcn_forward.1} parent=0 // pred_check
    _
  $region31: #{gcn_forward.1} parent=0 // pred_check_branch
    %470 = sbr.rel (0) target = $region33
  $region32: #{gcn_forward.1} parent=0 // pred_region
    _
  $region33: #{gcn_forward.1} parent=0 // pred_fallthru
    _

</llo_original>
